<compile_context>
chip_gen: v6e
topology: v6e:2x2x1
jax: 0.10.0
libtpu: 0.0.40
codegen_flags: <defaults>
</compile_context>

<pallas_src>
import functools

import jax
import jax.numpy as jnp
from jax.experimental import pallas as pl
from jax.experimental.pallas import tpu as pltpu

C1 = 0.01 ** 2
C2 = 0.03 ** 2


def _ssim_kernel(x_ref, y_ref, col_ref, o_ref, *, H, W):
    # x_ref / y_ref / o_ref: (bc, H*W) -- `bc` images, each flattened
    # row-major along the lane axis.  col_ref: (1, H*W) int32 column index.
    bc, HW = o_ref.shape

    x = x_ref[...].astype(jnp.float32)
    y = y_ref[...].astype(jnp.float32)

    # Boundary masks (hoisted: reused by all four pools).
    lane = jax.lax.broadcasted_iota(jnp.int32, (bc, HW), 1)
    row0 = lane < W                       # first image row
    rowL = lane >= (H - 1) * W            # last image row
    colv = jnp.broadcast_to(col_ref[...], (bc, HW))
    col0 = colv == 0                      # first image column
    colL = colv == (W - 1)                # last image column

    def pool_sum(a):
        # Separable 3x3 box *sum*, stride 1, reflection pad 1.
        # pltpu.roll follows jnp.roll semantics: roll(a, s)[l] == a[l - s].
        h_prev = pltpu.roll(a, W, axis=1)        # a[l - W]  (row above)
        h_next = pltpu.roll(a, HW - W, axis=1)   # a[l + W]  (row below)
        a = (a
             + jnp.where(row0, h_next, h_prev)   # reflect row -1 -> row 1
             + jnp.where(rowL, h_prev, h_next))  # reflect row H -> row H-2
        w_prev = pltpu.roll(a, 1, axis=1)        # a[l - 1]  (col left)
        w_next = pltpu.roll(a, HW - 1, axis=1)   # a[l + 1]  (col right)
        return (a
                + jnp.where(col0, w_next, w_prev)   # reflect col -1 -> col 1
                + jnp.where(colL, w_prev, w_next))  # reflect col W -> col W-2

    s_x = pool_sum(x)
    s_y = pool_sum(y)
    s_xy = pool_sum(x * y)
    s_xxyy = pool_sum(x * x + y * y)      # pool is linear: S_xx + S_yy

    # SSIM with the 1/9 normalization folded into the constants:
    #   mu = S/9, sigma = S2/9 - mu^2
    #   n = (1/81^2) (2 SxSy + 81 C1)(18 Sxy - 2 SxSy + 81 C2)
    #   d = (1/81^2) (Sx^2 + Sy^2 + 81 C1)(9 (Sxx+Syy) - Sx^2 - Sy^2 + 81 C2)
    # the 1/81^2 cancels in n/d.
    c1s = 81.0 * C1
    c2s = 81.0 * C2

    sxsy2 = 2.0 * (s_x * s_y)
    q = s_x * s_x + s_y * s_y

    num = (sxsy2 + c1s) * (18.0 * s_xy - sxsy2 + c2s)
    den = (q + c1s) * (9.0 * s_xxyy - q + c2s)

    # EUP reciprocal + one Newton refinement step (~f32 accuracy, frees VALU).
    r = pl.reciprocal(den, approx=True)
    r = r * (2.0 - den * r)

    out = jnp.clip(0.5 - 0.5 * (num * r), 0.0, 1.0)
    o_ref[...] = out.astype(o_ref.dtype)


def _pick_bc(BC, HW, itemsize, target_bytes=512 * 1024):
    """Images per block.  Valid values: multiples of 8 dividing BC, or BC
    itself (full extent).  Pick the largest one whose input block stays under
    `target_bytes` (amortizes per-grid-step overhead); else the smallest."""
    cands = {BC}
    for d in range(8, BC, 8):
        if BC % d == 0:
            cands.add(d)
    fitting = [d for d in cands if d * HW * itemsize <= target_bytes]
    return max(fitting) if fitting else min(cands)


def ssim_pallas(x, y):
    """SSIM loss between x and y; x, y are NCHW, returns NCHW."""
    assert x.shape == y.shape and x.ndim == 4
    B, C, H, W = x.shape
    assert H >= 2 and W >= 2, "reflection pad of 1 needs H, W >= 2"
    BC, HW = B * C, H * W
    itemsize = jnp.dtype(x.dtype).itemsize
    bc = _pick_bc(BC, HW, itemsize)
    G = BC // bc

    # Pure reshapes of contiguous NCHW -- no HBM transpose passes.
    xf = x.reshape(BC, HW)
    yf = y.reshape(BC, HW)
    # Per-lane image-column index for the W-border reflection fixups
    # (precomputed so the kernel needs no vector integer div/mod).
    col = (jnp.arange(HW, dtype=jnp.int32) % W).reshape(1, HW)

    kernel = functools.partial(_ssim_kernel, H=H, W=W)
    img_spec = pl.BlockSpec((bc, HW), lambda g: (g, 0))
    col_spec = pl.BlockSpec((1, HW), lambda g: (0, 0))

    # Raise the scoped-VMEM limit only when blocks are big enough to need it.
    blk_in = bc * HW * itemsize
    blk_f32 = bc * HW * 4
    vmem_est = 3 * 2 * blk_in + 18 * blk_f32
    cp = dict(dimension_semantics=("parallel",))
    if vmem_est > 12 * (1 << 20):
        cp["vmem_limit_bytes"] = int(min(2 * vmem_est, 64 * (1 << 20)))

    out = pl.pallas_call(
        kernel,
        out_shape=jax.ShapeDtypeStruct((BC, HW), x.dtype),
        grid=(G,),
        in_specs=[img_spec, img_spec, col_spec],
        out_specs=img_spec,
        compiler_params=pltpu.CompilerParams(**cp),
    )(xf, yf, col)

    return out.reshape(B, C, H, W)


def _ssim_ref(x, y):
    """Pure-JAX reference (mirrors the PyTorch forward exactly)."""
    pad = ((0, 0), (0, 0), (1, 1), (1, 1))
    xp = jnp.pad(x, pad, mode="reflect")
    yp = jnp.pad(y, pad, mode="reflect")

    def pool(a):
        _, _, Hp, Wp = a.shape
        H, W = Hp - 2, Wp - 2
        s = jnp.zeros(a.shape[:2] + (H, W), a.dtype)
        for di in range(3):
            for dj in range(3):
                s = s + a[:, :, di:di + H, dj:dj + W]
        return s / 9.0

    mu_x = pool(xp)
    mu_y = pool(yp)
    sigma_x = pool(xp * xp) - mu_x ** 2
    sigma_y = pool(yp * yp) - mu_y ** 2
    sigma_xy = pool(xp * yp) - mu_x * mu_y
    n = (2 * mu_x * mu_y + C1) * (2 * sigma_xy + C2)
    d = (mu_x ** 2 + mu_y ** 2 + C1) * (sigma_x + sigma_y + C2)
    return jnp.clip((1 - n / d) / 2, 0.0, 1.0)


if __name__ == "__main__":
    key = jax.random.PRNGKey(0)
    kx, ky = jax.random.split(key)
    B, C, H, W = 2, 4, 16, 16
    x = jax.random.uniform(kx, (B, C, H, W), dtype=jnp.float32)
    y = jax.random.uniform(ky, (B, C, H, W), dtype=jnp.float32)

    out = jax.block_until_ready(ssim_pallas(x, y))

    ref = _ssim_ref(x, y)
    assert out.shape == (B, C, H, W)
    assert jnp.allclose(out, ref, atol=1e-5, rtol=1e-5), float(
        jnp.max(jnp.abs(out - ref))
    )
    print("KERNEL_OK")
</pallas_src>

<mosaic_0001>
module attributes {stable_mosaic.version = 11 : i64} {
  func.func @_ssim_kernel(%arg0: i32, %arg1: memref<8x256xf32, #tpu.memory_space<vmem>>, %arg2: memref<8x256xf32, #tpu.memory_space<vmem>>, %arg3: memref<1x256xi32, #tpu.memory_space<vmem>>, %arg4: memref<8x256xf32, #tpu.memory_space<vmem>>) attributes {dimension_semantics = [#tpu.dimension_semantics<parallel>], iteration_bounds = array<i64: 1>, scalar_prefetch = 0 : i64, scratch_operands = 0 : i64, tpu.core_type = #tpu.core_type<tc>, window_params = [{transform_indices = @transform_0, window_bounds = array<i64: 8, 256>}, {transform_indices = @transform_1, window_bounds = array<i64: 8, 256>}, {pipeline_mode = #tpu.pipeline_mode<synchronous>, transform_indices = @transform_2, window_bounds = array<i64: 1, 256>}, {transform_indices = @transform_3, window_bounds = array<i64: 8, 256>}]} {
    %c0 = arith.constant 0 : index
    %c0_0 = arith.constant 0 : index
    %0 = vector.load %arg1[%c0, %c0_0] : memref<8x256xf32, #tpu.memory_space<vmem>>, vector<8x256xf32>
    %c0_1 = arith.constant 0 : index
    %c0_2 = arith.constant 0 : index
    %1 = vector.load %arg2[%c0_1, %c0_2] : memref<8x256xf32, #tpu.memory_space<vmem>>, vector<8x256xf32>
    %2 = tpu.iota {dimensions = array<i32: 1>} : vector<8x256xi32>
    %c16_i32 = arith.constant 16 : i32
    %3 = vector.broadcast %c16_i32 : i32 to vector<8x256xi32>
    %4 = arith.cmpi slt, %2, %3 : vector<8x256xi32>
    %c240_i32 = arith.constant 240 : i32
    %5 = vector.broadcast %c240_i32 : i32 to vector<8x256xi32>
    %6 = arith.cmpi sge, %2, %5 : vector<8x256xi32>
    %c0_3 = arith.constant 0 : index
    %c0_4 = arith.constant 0 : index
    %7 = vector.load %arg3[%c0_3, %c0_4] : memref<1x256xi32, #tpu.memory_space<vmem>>, vector<1x256xi32>
    %8 = vector.shape_cast %7 : vector<1x256xi32> to vector<1x256xi32>
    %9 = vector.broadcast %8 : vector<1x256xi32> to vector<8x256xi32>
    %c0_i32 = arith.constant 0 : i32
    %10 = vector.broadcast %c0_i32 : i32 to vector<8x256xi32>
    %11 = arith.cmpi eq, %9, %10 : vector<8x256xi32>
    %c15_i32 = arith.constant 15 : i32
    %12 = vector.broadcast %c15_i32 : i32 to vector<8x256xi32>
    %13 = arith.cmpi eq, %9, %12 : vector<8x256xi32>
    %c16_i32_5 = arith.constant 16 : i32
    %14 = tpu.dynamic_rotate %0 by %c16_i32_5 dim 1 : vector<8x256xf32>, i32 -> vector<8x256xf32>
    %c240_i32_6 = arith.constant 240 : i32
    %15 = tpu.dynamic_rotate %0 by %c240_i32_6 dim 1 : vector<8x256xf32>, i32 -> vector<8x256xf32>
    %16 = arith.select %4, %15, %14 : vector<8x256xi1>, vector<8x256xf32>
    %17 = arith.addf %0, %16 : vector<8x256xf32>
    %18 = arith.select %6, %14, %15 : vector<8x256xi1>, vector<8x256xf32>
    %19 = arith.addf %17, %18 : vector<8x256xf32>
    %c1_i32 = arith.constant 1 : i32
    %20 = tpu.dynamic_rotate %19 by %c1_i32 dim 1 : vector<8x256xf32>, i32 -> vector<8x256xf32>
    %c255_i32 = arith.constant 255 : i32
    %21 = tpu.dynamic_rotate %19 by %c255_i32 dim 1 : vector<8x256xf32>, i32 -> vector<8x256xf32>
    %22 = arith.select %11, %21, %20 : vector<8x256xi1>, vector<8x256xf32>
    %23 = arith.addf %19, %22 : vector<8x256xf32>
    %24 = arith.select %13, %20, %21 : vector<8x256xi1>, vector<8x256xf32>
    %25 = arith.addf %23, %24 : vector<8x256xf32>
    %c16_i32_7 = arith.constant 16 : i32
    %26 = tpu.dynamic_rotate %1 by %c16_i32_7 dim 1 : vector<8x256xf32>, i32 -> vector<8x256xf32>
    %c240_i32_8 = arith.constant 240 : i32
    %27 = tpu.dynamic_rotate %1 by %c240_i32_8 dim 1 : vector<8x256xf32>, i32 -> vector<8x256xf32>
    %28 = arith.select %4, %27, %26 : vector<8x256xi1>, vector<8x256xf32>
    %29 = arith.addf %1, %28 : vector<8x256xf32>
    %30 = arith.select %6, %26, %27 : vector<8x256xi1>, vector<8x256xf32>
    %31 = arith.addf %29, %30 : vector<8x256xf32>
    %c1_i32_9 = arith.constant 1 : i32
    %32 = tpu.dynamic_rotate %31 by %c1_i32_9 dim 1 : vector<8x256xf32>, i32 -> vector<8x256xf32>
    %c255_i32_10 = arith.constant 255 : i32
    %33 = tpu.dynamic_rotate %31 by %c255_i32_10 dim 1 : vector<8x256xf32>, i32 -> vector<8x256xf32>
    %34 = arith.select %11, %33, %32 : vector<8x256xi1>, vector<8x256xf32>
    %35 = arith.addf %31, %34 : vector<8x256xf32>
    %36 = arith.select %13, %32, %33 : vector<8x256xi1>, vector<8x256xf32>
    %37 = arith.addf %35, %36 : vector<8x256xf32>
    %38 = arith.mulf %0, %1 : vector<8x256xf32>
    %c16_i32_11 = arith.constant 16 : i32
    %39 = tpu.dynamic_rotate %38 by %c16_i32_11 dim 1 : vector<8x256xf32>, i32 -> vector<8x256xf32>
    %c240_i32_12 = arith.constant 240 : i32
    %40 = tpu.dynamic_rotate %38 by %c240_i32_12 dim 1 : vector<8x256xf32>, i32 -> vector<8x256xf32>
    %41 = arith.select %4, %40, %39 : vector<8x256xi1>, vector<8x256xf32>
    %42 = arith.addf %38, %41 : vector<8x256xf32>
    %43 = arith.select %6, %39, %40 : vector<8x256xi1>, vector<8x256xf32>
    %44 = arith.addf %42, %43 : vector<8x256xf32>
    %c1_i32_13 = arith.constant 1 : i32
    %45 = tpu.dynamic_rotate %44 by %c1_i32_13 dim 1 : vector<8x256xf32>, i32 -> vector<8x256xf32>
    %c255_i32_14 = arith.constant 255 : i32
    %46 = tpu.dynamic_rotate %44 by %c255_i32_14 dim 1 : vector<8x256xf32>, i32 -> vector<8x256xf32>
    %47 = arith.select %11, %46, %45 : vector<8x256xi1>, vector<8x256xf32>
    %48 = arith.addf %44, %47 : vector<8x256xf32>
    %49 = arith.select %13, %45, %46 : vector<8x256xi1>, vector<8x256xf32>
    %50 = arith.addf %48, %49 : vector<8x256xf32>
    %51 = arith.mulf %0, %0 : vector<8x256xf32>
    %52 = arith.mulf %1, %1 : vector<8x256xf32>
    %53 = arith.addf %51, %52 : vector<8x256xf32>
    %c16_i32_15 = arith.constant 16 : i32
    %54 = tpu.dynamic_rotate %53 by %c16_i32_15 dim 1 : vector<8x256xf32>, i32 -> vector<8x256xf32>
    %c240_i32_16 = arith.constant 240 : i32
    %55 = tpu.dynamic_rotate %53 by %c240_i32_16 dim 1 : vector<8x256xf32>, i32 -> vector<8x256xf32>
    %56 = arith.select %4, %55, %54 : vector<8x256xi1>, vector<8x256xf32>
    %57 = arith.addf %53, %56 : vector<8x256xf32>
    %58 = arith.select %6, %54, %55 : vector<8x256xi1>, vector<8x256xf32>
    %59 = arith.addf %57, %58 : vector<8x256xf32>
    %c1_i32_17 = arith.constant 1 : i32
    %60 = tpu.dynamic_rotate %59 by %c1_i32_17 dim 1 : vector<8x256xf32>, i32 -> vector<8x256xf32>
    %c255_i32_18 = arith.constant 255 : i32
    %61 = tpu.dynamic_rotate %59 by %c255_i32_18 dim 1 : vector<8x256xf32>, i32 -> vector<8x256xf32>
    %62 = arith.select %11, %61, %60 : vector<8x256xi1>, vector<8x256xf32>
    %63 = arith.addf %59, %62 : vector<8x256xf32>
    %64 = arith.select %13, %60, %61 : vector<8x256xi1>, vector<8x256xf32>
    %65 = arith.addf %63, %64 : vector<8x256xf32>
    %66 = arith.mulf %25, %37 : vector<8x256xf32>
    %cst = arith.constant 2.000000e+00 : f32
    %67 = vector.broadcast %cst : f32 to vector<8x256xf32>
    %68 = arith.mulf %67, %66 : vector<8x256xf32>
    %69 = arith.mulf %25, %25 : vector<8x256xf32>
    %70 = arith.mulf %37, %37 : vector<8x256xf32>
    %71 = arith.addf %69, %70 : vector<8x256xf32>
    %cst_19 = arith.constant 8.100000e-03 : f32
    %72 = vector.broadcast %cst_19 : f32 to vector<8x256xf32>
    %73 = arith.addf %68, %72 : vector<8x256xf32>
    %cst_20 = arith.constant 1.800000e+01 : f32
    %74 = vector.broadcast %cst_20 : f32 to vector<8x256xf32>
    %75 = arith.mulf %74, %50 : vector<8x256xf32>
    %76 = arith.subf %75, %68 : vector<8x256xf32>
    %cst_21 = arith.constant 7.290000e-02 : f32
    %77 = vector.broadcast %cst_21 : f32 to vector<8x256xf32>
    %78 = arith.addf %76, %77 : vector<8x256xf32>
    %79 = arith.mulf %73, %78 : vector<8x256xf32>
    %cst_22 = arith.constant 8.100000e-03 : f32
    %80 = vector.broadcast %cst_22 : f32 to vector<8x256xf32>
    %81 = arith.addf %71, %80 : vector<8x256xf32>
    %cst_23 = arith.constant 9.000000e+00 : f32
    %82 = vector.broadcast %cst_23 : f32 to vector<8x256xf32>
    %83 = arith.mulf %82, %65 : vector<8x256xf32>
    %84 = arith.subf %83, %71 : vector<8x256xf32>
    %cst_24 = arith.constant 7.290000e-02 : f32
    %85 = vector.broadcast %cst_24 : f32 to vector<8x256xf32>
    %86 = arith.addf %84, %85 : vector<8x256xf32>
    %87 = arith.mulf %81, %86 : vector<8x256xf32>
    %88 = tpu.reciprocal %87 {approx = true} : vector<8x256xf32> -> vector<8x256xf32>
    %89 = arith.mulf %87, %88 : vector<8x256xf32>
    %cst_25 = arith.constant 2.000000e+00 : f32
    %90 = vector.broadcast %cst_25 : f32 to vector<8x256xf32>
    %91 = arith.subf %90, %89 : vector<8x256xf32>
    %92 = arith.mulf %88, %91 : vector<8x256xf32>
    %93 = arith.mulf %79, %92 : vector<8x256xf32>
    %cst_26 = arith.constant 5.000000e-01 : f32
    %94 = vector.broadcast %cst_26 : f32 to vector<8x256xf32>
    %95 = arith.mulf %94, %93 : vector<8x256xf32>
    %cst_27 = arith.constant 5.000000e-01 : f32
    %96 = vector.broadcast %cst_27 : f32 to vector<8x256xf32>
    %97 = arith.subf %96, %95 : vector<8x256xf32>
    %cst_28 = arith.constant 0.000000e+00 : f32
    %cst_29 = arith.constant 1.000000e+00 : f32
    %98 = vector.broadcast %cst_28 : f32 to vector<8x256xf32>
    %99 = arith.maximumf %98, %97 : vector<8x256xf32>
    %100 = vector.broadcast %cst_29 : f32 to vector<8x256xf32>
    %101 = arith.minimumf %100, %99 : vector<8x256xf32>
    %c0_30 = arith.constant 0 : index
    %c0_31 = arith.constant 0 : index
    %102 = vector.load %arg4[%c0_30, %c0_31] : memref<8x256xf32, #tpu.memory_space<vmem>>, vector<8x256xf32>
    tpu.vector_store %arg4[%c0_30, %c0_31], %101 {strides = array<i32>} : memref<8x256xf32, #tpu.memory_space<vmem>>, vector<8x256xf32>,
    return
  }
  func.func @transform_0(%arg0: i32) -> (i32, i32) {
    %c0_i32 = arith.constant 0 : i32
    %c0_i32_0 = arith.constant 0 : i32
    return %arg0, %c0_i32 : i32, i32
  }
  func.func @transform_1(%arg0: i32) -> (i32, i32) {
    %c0_i32 = arith.constant 0 : i32
    %c0_i32_0 = arith.constant 0 : i32
    return %arg0, %c0_i32 : i32, i32
  }
  func.func @transform_2(%arg0: i32) -> (i32, i32) {
    %c0_i32 = arith.constant 0 : i32
    %c0_i32_0 = arith.constant 0 : i32
    %c0_i32_1 = arith.constant 0 : i32
    return %c0_i32, %c0_i32_0 : i32, i32
  }
  func.func @transform_3(%arg0: i32) -> (i32, i32) {
    %c0_i32 = arith.constant 0 : i32
    %c0_i32_0 = arith.constant 0 : i32
    return %arg0, %c0_i32 : i32, i32
  }
}

</mosaic_0001>

<llo_original>
// kernel: tpu_custom_call.1
$region0: #{tpu_custom_call.1}
  #allocation0 [shape = 'u32[]', space=smem, size = 0x4, offset = 0x4, fixed_abs, tag = 'smem constant byte address 0x4 - core index']
  #allocation1 [shape = 'u32[144,128]{1,0:T(1,128)}', space=vmem, size = 0x12000, scoped, tag = 'internal scratch']
  %s0 = inlined_call_operand.hbm [shape: f32[8,256], index: 0, kind: input, shape index: {}]
  %s1 = inlined_call_operand.hbm [shape: f32[8,256], index: 1, kind: input, shape index: {}]
  %s2 = inlined_call_operand.vmem [shape: s32[1,256], index: 2, kind: input, shape index: {}]
  %s3 = inlined_call_operand.hbm [shape: f32[8,256], index: 3, kind: output, shape index: {}]
  %s4 = sld [smem:[#allocation0]]
  $region30: #{tpu_custom_call.1} parent=0
    _
  %s6 = ssub.s32 1, %s4
  %s7 = scalar_select 0, %s6, %s4
  $region1: #{tpu_custom_call.1} parent=0
    #allocation2 [shape = 'u8[8192]{0}', space=vmem, size = 0x2000, scoped, tag = 'input window, operand 0, single buffered']
    #allocation3 [shape = 's32[1]{0}', space=sflag, size = 0x4, scoped, tag = 'scoped memory for tpu_custom_call.1']
    #allocation4 [shape = 's32[1]{0}', space=sflag, size = 0x4, scoped, tag = 'scoped memory for tpu_custom_call.1']
    #allocation5 [shape = 'u8[8192]{0}', space=vmem, size = 0x2000, scoped, tag = 'input window, operand 1, single buffered']
    #allocation6 [shape = 's32[1]{0}', space=sflag, size = 0x4, scoped, tag = 'scoped memory for tpu_custom_call.1']
    #allocation7 [shape = 'u8[8192]{0}', space=vmem, size = 0x2000, scoped, tag = 'output window, operand 0, single buffered']
    %8 = vsyncpa [#allocation3], 0
    %9 = vsyncpa [#allocation6], 0
    %10 = vsyncpa [#allocation4], 0
    // Predicated region
    $region2: #{tpu_custom_call.1} parent=1 // pred_check
      _
    $region3: #{tpu_custom_call.1} parent=1 // pred_check_branch
      %12 = sbr.rel (0) target = $region5
    $region4: #{tpu_custom_call.1} parent=1 // pred_region
      %s14 = ssub.s32 256, 256
      %15 = vsyncadd [#allocation3], %s14
      %s17 = sshll.u32 [#allocation2], 4
      %s18 = int_to_ptr.vmem [resolvable:$true] %s17
      %20 = dma.hbm_to_vmem [thread:$0]  %s0, 256, %s18, [#allocation3]
    $region5: #{tpu_custom_call.1} parent=1 // pred_fallthru
      _
    // Predicated region
    $region6: #{tpu_custom_call.1} parent=1 // pred_check
      _
    $region7: #{tpu_custom_call.1} parent=1 // pred_check_branch
      %22 = sbr.rel (0) target = $region9
    $region8: #{tpu_custom_call.1} parent=1 // pred_region
      %s24 = ssub.s32 256, 256
      %25 = vsyncadd [#allocation6], %s24
      %s27 = sshll.u32 [#allocation5], 4
      %s28 = int_to_ptr.vmem [resolvable:$true] %s27
      %30 = dma.hbm_to_vmem [thread:$0]  %s1, 256, %s28, [#allocation6]
    $region9: #{tpu_custom_call.1} parent=1 // pred_fallthru
      _
    // Predicated region
    $region10: #{tpu_custom_call.1} parent=1 // pred_check
      _
    $region11: #{tpu_custom_call.1} parent=1 // pred_check_branch
      %32 = sbr.rel (0) target = $region13
    $region12: #{tpu_custom_call.1} parent=1 // pred_region
      _
    $region13: #{tpu_custom_call.1} parent=1 // pred_fallthru
      _
    // Predicated region
    $region14: #{tpu_custom_call.1} parent=1 // pred_check
      _
    $region15: #{tpu_custom_call.1} parent=1 // pred_check_branch
      %34 = sbr.rel (0) target = $region17
    $region16: #{tpu_custom_call.1} parent=1 // pred_region
      %35 = dma.done [#allocation3], 256
    $region17: #{tpu_custom_call.1} parent=1 // pred_fallthru
      _
    // Predicated region
    $region18: #{tpu_custom_call.1} parent=1 // pred_check
      _
    $region19: #{tpu_custom_call.1} parent=1 // pred_check_branch
      %37 = sbr.rel (0) target = $region21
    $region20: #{tpu_custom_call.1} parent=1 // pred_region
      %38 = dma.done [#allocation6], 256
    $region21: #{tpu_custom_call.1} parent=1 // pred_fallthru
      _
    %v39 = vld [vmem:[#allocation2] sm:$0xff]
    %v40 = vld [vmem:[#allocation2 + $0x8] sm:$0xff]
    %v41 = vld [vmem:[#allocation5] sm:$0xff]
    %v42 = vld [vmem:[#allocation5 + $0x8] sm:$0xff]
    %v43 = vlaneseq
    %v44 = vand.u32 %v43, 127
    %v45 = vadd.s32 %v44, 128
    %vm46 = vcmp.lt.s32.totalorder %v44, 16
    %vm47 = vcmp.lt.s32.totalorder %v45, 16
    %vm48 = vcmp.ge.s32.totalorder %v44, 240
    %vm49 = vcmp.ge.s32.totalorder %v45, 240
    %v50 = vld [vmem:[%s2] sm:$0x3]
    %v51 = vlaneseq
    %v52 = vshrl.u32 %v51, 7
    %v53 = vsub.s32 0, %v52
    %v54 = vrot.slane %v50, %v53
    %v55 = vlaneseq
    %v56 = vshrl.u32 %v55, 7
    %v57 = vsub.s32 1, %v56
    %v58 = vrot.slane %v50, %v57
    %vm59 = vcmp.eq.s32.totalorder %v54, 0
    %vm60 = vcmp.eq.s32.totalorder %v58, 0
    %vm61 = vcmp.eq.s32.totalorder %v54, 15
    %vm62 = vcmp.eq.s32.totalorder %v58, 15
    %63 = vrot.lane.b32.xlu0 %v39, 16
    %v64 = vpop.permute.xlu0 %63
    %65 = vrot.lane.b32.xlu0 %v40, 16
    %v66 = vpop.permute.xlu0 %65
    %v67 = vsel %vm46, %v64, %v66
    %v68 = vsel %vm46, %v66, %v64
    %69 = vrot.lane.b32.xlu0 %v39, 112
    %v70 = vpop.permute.xlu0 %69
    %71 = vrot.lane.b32.xlu0 %v40, 112
    %v72 = vpop.permute.xlu0 %71
    %vm73 = vcmp.lt.s32.totalorder %v44, 112
    %v74 = vsel %vm73, %v70, %v72
    %v75 = vsel %vm73, %v72, %v70
    %v76 = vsel %vm46, %v74, %v68
    %v77 = vsel %vm47, %v75, %v67
    %v78 = vadd.f32 %v39, %v76
    %v79 = vadd.f32 %v40, %v77
    %v80 = vsel %vm48, %v68, %v74
    %v81 = vsel %vm49, %v67, %v75
    %v82 = vadd.f32 %v78, %v80
    %v83 = vadd.f32 %v79, %v81
    %84 = vrot.lane.b32.xlu0 %v82, 1
    %v85 = vpop.permute.xlu0 %84
    %86 = vrot.lane.b32.xlu0 %v83, 1
    %v87 = vpop.permute.xlu0 %86
    %vm88 = vcmp.lt.s32.totalorder %v44, 1
    %v89 = vsel %vm88, %v85, %v87
    %v90 = vsel %vm88, %v87, %v85
    %91 = vrot.lane.b32.xlu0 %v82, 127
    %v92 = vpop.permute.xlu0 %91
    %93 = vrot.lane.b32.xlu0 %v83, 127
    %v94 = vpop.permute.xlu0 %93
    %vm95 = vcmp.lt.s32.totalorder %v44, 127
    %v96 = vsel %vm95, %v92, %v94
    %v97 = vsel %vm95, %v94, %v92
    %v98 = vsel %vm59, %v96, %v90
    %v99 = vsel %vm60, %v97, %v89
    %v100 = vadd.f32 %v82, %v98
    %v101 = vadd.f32 %v83, %v99
    %v102 = vsel %vm61, %v90, %v96
    %v103 = vsel %vm62, %v89, %v97
    %v104 = vadd.f32 %v100, %v102
    %v105 = vadd.f32 %v101, %v103
    %106 = vrot.lane.b32.xlu0 %v41, 16
    %v107 = vpop.permute.xlu0 %106
    %108 = vrot.lane.b32.xlu0 %v42, 16
    %v109 = vpop.permute.xlu0 %108
    %v110 = vsel %vm46, %v107, %v109
    %v111 = vsel %vm46, %v109, %v107
    %112 = vrot.lane.b32.xlu0 %v41, 112
    %v113 = vpop.permute.xlu0 %112
    %114 = vrot.lane.b32.xlu0 %v42, 112
    %v115 = vpop.permute.xlu0 %114
    %v116 = vsel %vm73, %v113, %v115
    %v117 = vsel %vm73, %v115, %v113
    %v118 = vsel %vm46, %v116, %v111
    %v119 = vsel %vm47, %v117, %v110
    %v120 = vadd.f32 %v41, %v118
    %v121 = vadd.f32 %v42, %v119
    %v122 = vsel %vm48, %v111, %v116
    %v123 = vsel %vm49, %v110, %v117
    %v124 = vadd.f32 %v120, %v122
    %v125 = vadd.f32 %v121, %v123
    %126 = vrot.lane.b32.xlu0 %v124, 1
    %v127 = vpop.permute.xlu0 %126
    %128 = vrot.lane.b32.xlu0 %v125, 1
    %v129 = vpop.permute.xlu0 %128
    %v130 = vsel %vm88, %v127, %v129
    %v131 = vsel %vm88, %v129, %v127
    %132 = vrot.lane.b32.xlu0 %v124, 127
    %v133 = vpop.permute.xlu0 %132
    %134 = vrot.lane.b32.xlu0 %v125, 127
    %v135 = vpop.permute.xlu0 %134
    %v136 = vsel %vm95, %v133, %v135
    %v137 = vsel %vm95, %v135, %v133
    %v138 = vsel %vm59, %v136, %v131
    %v139 = vsel %vm60, %v137, %v130
    %v140 = vadd.f32 %v124, %v138
    %v141 = vadd.f32 %v125, %v139
    %v142 = vsel %vm61, %v131, %v136
    %v143 = vsel %vm62, %v130, %v137
    %v144 = vadd.f32 %v140, %v142
    %v145 = vadd.f32 %v141, %v143
    %v146 = vmul.f32 %v39, %v41
    %v147 = vmul.f32 %v40, %v42
    %148 = vrot.lane.b32.xlu0 %v146, 16
    %v149 = vpop.permute.xlu0 %148
    %150 = vrot.lane.b32.xlu0 %v147, 16
    %v151 = vpop.permute.xlu0 %150
    %v152 = vsel %vm46, %v149, %v151
    %v153 = vsel %vm46, %v151, %v149
    %154 = vrot.lane.b32.xlu0 %v146, 112
    %v155 = vpop.permute.xlu0 %154
    %156 = vrot.lane.b32.xlu0 %v147, 112
    %v157 = vpop.permute.xlu0 %156
    %v158 = vsel %vm73, %v155, %v157
    %v159 = vsel %vm73, %v157, %v155
    %v160 = vsel %vm46, %v158, %v153
    %v161 = vsel %vm47, %v159, %v152
    %v162 = vadd.f32 %v146, %v160
    %v163 = vadd.f32 %v147, %v161
    %v164 = vsel %vm48, %v153, %v158
    %v165 = vsel %vm49, %v152, %v159
    %v166 = vadd.f32 %v162, %v164
    %v167 = vadd.f32 %v163, %v165
    %168 = vrot.lane.b32.xlu0 %v166, 1
    %v169 = vpop.permute.xlu0 %168
    %170 = vrot.lane.b32.xlu0 %v167, 1
    %v171 = vpop.permute.xlu0 %170
    %v172 = vsel %vm88, %v169, %v171
    %v173 = vsel %vm88, %v171, %v169
    %174 = vrot.lane.b32.xlu0 %v166, 127
    %v175 = vpop.permute.xlu0 %174
    %176 = vrot.lane.b32.xlu0 %v167, 127
    %v177 = vpop.permute.xlu0 %176
    %v178 = vsel %vm95, %v175, %v177
    %v179 = vsel %vm95, %v177, %v175
    %v180 = vsel %vm59, %v178, %v173
    %v181 = vsel %vm60, %v179, %v172
    %v182 = vadd.f32 %v166, %v180
    %v183 = vadd.f32 %v167, %v181
    %v184 = vsel %vm61, %v173, %v178
    %v185 = vsel %vm62, %v172, %v179
    %v186 = vadd.f32 %v182, %v184
    %v187 = vadd.f32 %v183, %v185
    %v188 = vmul.f32 %v39, %v39
    %v189 = vmul.f32 %v40, %v40
    %v190 = vmul.f32 %v41, %v41
    %v191 = vmul.f32 %v42, %v42
    %v192 = vadd.f32 %v188, %v190
    %v193 = vadd.f32 %v189, %v191
    %194 = vrot.lane.b32.xlu0 %v192, 16
    %v195 = vpop.permute.xlu0 %194
    %196 = vrot.lane.b32.xlu0 %v193, 16
    %v197 = vpop.permute.xlu0 %196
    %v198 = vsel %vm46, %v195, %v197
    %v199 = vsel %vm46, %v197, %v195
    %200 = vrot.lane.b32.xlu0 %v192, 112
    %v201 = vpop.permute.xlu0 %200
    %202 = vrot.lane.b32.xlu0 %v193, 112
    %v203 = vpop.permute.xlu0 %202
    %v204 = vsel %vm73, %v201, %v203
    %v205 = vsel %vm73, %v203, %v201
    %v206 = vsel %vm46, %v204, %v199
    %v207 = vsel %vm47, %v205, %v198
    %v208 = vadd.f32 %v192, %v206
    %v209 = vadd.f32 %v193, %v207
    %v210 = vsel %vm48, %v199, %v204
    %v211 = vsel %vm49, %v198, %v205
    %v212 = vadd.f32 %v208, %v210
    %v213 = vadd.f32 %v209, %v211
    %214 = vrot.lane.b32.xlu0 %v212, 1
    %v215 = vpop.permute.xlu0 %214
    %216 = vrot.lane.b32.xlu0 %v213, 1
    %v217 = vpop.permute.xlu0 %216
    %v218 = vsel %vm88, %v215, %v217
    %v219 = vsel %vm88, %v217, %v215
    %220 = vrot.lane.b32.xlu0 %v212, 127
    %v221 = vpop.permute.xlu0 %220
    %222 = vrot.lane.b32.xlu0 %v213, 127
    %v223 = vpop.permute.xlu0 %222
    %v224 = vsel %vm95, %v221, %v223
    %v225 = vsel %vm95, %v223, %v221
    %v226 = vsel %vm59, %v224, %v219
    %v227 = vsel %vm60, %v225, %v218
    %v228 = vadd.f32 %v212, %v226
    %v229 = vadd.f32 %v213, %v227
    %v230 = vsel %vm61, %v219, %v224
    %v231 = vsel %vm62, %v218, %v225
    %v232 = vadd.f32 %v228, %v230
    %v233 = vadd.f32 %v229, %v231
    %v234 = vmul.f32 %v104, %v144
    %v235 = vmul.f32 %v105, %v145
    %v236 = vmul.f32 %v234, 2.0
    %v237 = vmul.f32 %v235, 2.0
    %v238 = vmul.f32 %v104, %v104
    %v239 = vmul.f32 %v105, %v105
    %v240 = vmul.f32 %v144, %v144
    %v241 = vmul.f32 %v145, %v145
    %v242 = vadd.f32 %v238, %v240
    %v243 = vadd.f32 %v239, %v241
    %v244 = vadd.f32 %v236, 0.0081
    %v245 = vadd.f32 %v237, 0.0081
    %v246 = vmul.f32 %v186, 18.0
    %v247 = vmul.f32 %v187, 18.0
    %v248 = vsub.f32 %v246, %v236
    %v249 = vsub.f32 %v247, %v237
    %v250 = vadd.f32 %v248, 0.0729
    %v251 = vadd.f32 %v249, 0.0729
    %v252 = vmul.f32 %v244, %v250
    %v253 = vmul.f32 %v245, %v251
    %v254 = vadd.f32 %v242, 0.0081
    %v255 = vadd.f32 %v243, 0.0081
    %v256 = vmul.f32 %v232, 9.0
    %v257 = vmul.f32 %v233, 9.0
    %v258 = vsub.f32 %v256, %v242
    %v259 = vsub.f32 %v257, %v243
    %v260 = vadd.f32 %v258, 0.0729
    %v261 = vadd.f32 %v259, 0.0729
    %v262 = vmul.f32 %v254, %v260
    %v263 = vmul.f32 %v255, %v261
    %v264 = vrcp.pop %v262
    %v265 = vrcp.pop %v263
    %v266 = vmul.f32 %v262, %v264
    %v267 = vmul.f32 %v263, %v265
    %v268 = vsub.f32 2.0, %v266
    %v269 = vsub.f32 2.0, %v267
    %v270 = vmul.f32 %v264, %v268
    %v271 = vmul.f32 %v265, %v269
    %v272 = vmul.f32 %v252, %v270
    %v273 = vmul.f32 %v253, %v271
    %v274 = vmul.f32 %v272, 0.5
    %v275 = vmul.f32 %v273, 0.5
    %v276 = vsub.f32 0.5, %v274
    %v277 = vsub.f32 0.5, %v275
    %v278 = vmax.f32 %v276, 0.0
    %v279 = vmax.f32 %v277, 0.0
    %v280 = vmin.f32 %v278, 1.0
    %v281 = vmin.f32 %v279, 1.0
    %282 = vst [vmem:[#allocation7] sm:$0xff] %v280
    %283 = vst [vmem:[#allocation7 + $0x8] sm:$0xff] %v281
    // Predicated region
    $region22: #{tpu_custom_call.1} parent=1 // pred_check
      _
    $region23: #{tpu_custom_call.1} parent=1 // pred_check_branch
      %285 = sbr.rel (0) target = $region25
    $region24: #{tpu_custom_call.1} parent=1 // pred_region
      %s287 = ssub.s32 256, 256
      %288 = vsyncadd [#allocation4], %s287
      %s290 = sshll.u32 [#allocation7], 4
      %s291 = int_to_ptr.vmem [resolvable:$true] %s290
      %293 = dma.vmem_to_hbm [thread:$0]  %s291, 256, %s3, [#allocation4]
    $region25: #{tpu_custom_call.1} parent=1 // pred_fallthru
      _
    // Predicated region
    $region26: #{tpu_custom_call.1} parent=1 // pred_check
      _
    $region27: #{tpu_custom_call.1} parent=1 // pred_check_branch
      %295 = sbr.rel (0) target = $region29
    $region28: #{tpu_custom_call.1} parent=1 // pred_region
      %296 = dma.done [#allocation4], 256
    $region29: #{tpu_custom_call.1} parent=1 // pred_fallthru
      _
    %297 = vsyncpa [#allocation3], 1
    %298 = vsyncpa [#allocation6], 1
    %299 = vsyncpa [#allocation4], 1

</llo_original>
